<compile_context>
chip_gen: v7x
topology: tpu7x:2x2x1
jax: 0.10.0
libtpu: 0.0.40
codegen_flags: <defaults>
</compile_context>

<pallas_src>
import functools

import jax
import jax.numpy as jnp
from jax.experimental import pallas as pl
from jax.experimental.pallas import tpu as pltpu


def _tpu_params():
    """(block_target_bytes, vmem_cap_bytes, tensorcores_per_chip) per generation."""
    kind = ""
    try:
        kind = jax.devices()[0].device_kind.lower()
    except Exception:
        pass
    if "v7" in kind:                       # v7x: 64 MiB VMEM/TC, 3.2 TB/s, 2 TCs
        return 7 * 2**20, 52 * 2**20, 2
    if "v6" in kind:                       # v6e: 128 MiB VMEM, ~1.4 TB/s, 1 TC
        return 4 * 2**20, 96 * 2**20, 1
    if "v5 lite" in kind or "v5e" in kind or "v5lite" in kind:
        return 4 * 2**20, 96 * 2**20, 1    # v5e: 128 MiB VMEM, ~0.82 TB/s, 1 TC
    if "v4" in kind or "v5" in kind:       # v4 / v5p: megacore (2 TCs)
        return 4 * 2**20, 64 * 2**20, 2
    return 2 * 2**20, 32 * 2**20, 1        # unknown: conservative defaults


def _pick_nb(N, per_sample, block_target, num_tc):
    """Samples per grid step: ~block_target bytes, megacore-friendly step count."""
    nb = max(1, min(N, block_target // max(per_sample, 1)))
    if num_tc >= 2 and N >= 2:
        nb = min(nb, max(1, N // 2))       # at least 2 grid steps for 2 TCs
    if nb >= 8:
        nb = (nb // 8) * 8                 # full sublane tiles for the MLP matmuls
    steps = -(-N // nb)
    if num_tc >= 2 and steps > 1 and steps % 2 == 1:
        nb_even = -(-N // (steps + 1))     # even step count -> balanced TC load
        if nb_even >= 1:
            nb = nb_even
    return nb


# ----------------------------- fused kernel ---------------------------------

def _se_fused_kernel(x_ref, w1t_ref, b1_ref, w2t_ref, b2_ref, o_ref, *, inv_hw):
    # x_ref: (nb, C, HW)  w1t: (C, Cr)  b1: (1, Cr)  w2t: (Cr, C)  b2: (1, C)
    x = x_ref[...]                                              # native dtype
    pooled = jnp.sum(x, axis=-1, dtype=jnp.float32) * inv_hw    # (nb, C) f32
    h = jnp.dot(pooled, w1t_ref[...], preferred_element_type=jnp.float32)
    h = jnp.maximum(h + b1_ref[...], 0.0)                       # (nb, Cr)
    s = jnp.dot(h, w2t_ref[...], preferred_element_type=jnp.float32)
    s = jax.nn.sigmoid(s + b2_ref[...])                         # (nb, C)
    # Channel-wise rescale in the input dtype (no f32 copy of the big tile).
    o_ref[...] = x * s.astype(x.dtype)[:, :, None]


# ----------------------- split (fallback) kernels ----------------------------

def _se_pool_mlp_kernel(x_ref, w1t_ref, b1_ref, w2t_ref, b2_ref, s_ref, acc_ref,
                        *, inv_hw, hw, thw):
    # Accumulate the avg-pool over HW tiles; run the tiny MLP on the last tile.
    k = pl.program_id(1)

    @pl.when(k == 0)
    def _():
        acc_ref[...] = jnp.zeros_like(acc_ref)

    x = x_ref[...]                                              # (nb, C, thw)
    lane = jax.lax.broadcasted_iota(jnp.int32, x.shape, 2) + k * thw
    xm = jnp.where(lane < hw, x, jnp.zeros_like(x))             # mask padded lanes
    acc_ref[...] += jnp.sum(xm, axis=-1, dtype=jnp.float32)     # (nb, C) f32

    @pl.when(k == pl.num_programs(1) - 1)
    def _():
        pooled = acc_ref[...] * inv_hw
        h = jnp.dot(pooled, w1t_ref[...], preferred_element_type=jnp.float32)
        h = jnp.maximum(h + b1_ref[...], 0.0)
        s = jax.nn.sigmoid(
            jnp.dot(h, w2t_ref[...], preferred_element_type=jnp.float32)
            + b2_ref[...])
        s_ref[...] = s[:, None, :]                              # (nb, 1, C) f32


def _se_rescale_kernel(x_ref, s_ref, o_ref):
    x = x_ref[...]                                              # (nb, C, thw)
    s = s_ref[...][:, 0, :].astype(x.dtype)                     # (nb, C)
    o_ref[...] = x * s[:, :, None]


# ------------------------------- wrapper -------------------------------------

def se_module_forward(x_nchw, w1, b1, w2, b2):
    """x_nchw: (N, C, H, W). Weights follow nn.Linear convention:
    w1: (C//r, C), b1: (C//r,), w2: (C, C//r), b2: (C,)."""
    N, C, H, W = x_nchw.shape
    Cr = w1.shape[0]
    HW = H * W
    itemsize = jnp.dtype(x_nchw.dtype).itemsize
    block_target, vmem_cap, num_tc = _tpu_params()

    x_flat = x_nchw.reshape(N, C, HW)      # contiguous reshape; no pad, no slice

    # Pre-transpose weights so the kernel does plain (nb,C)@(C,Cr) etc.
    w1t = jnp.asarray(w1).T                # (C, Cr)
    w2t = jnp.asarray(w2).T                # (Cr, C)
    b1_2d = jnp.asarray(b1).reshape(1, Cr)
    b2_2d = jnp.asarray(b2).reshape(1, C)
    weights_bytes = (w1t.size * w1t.dtype.itemsize
                     + w2t.size * w2t.dtype.itemsize
                     + b1_2d.size * b1_2d.dtype.itemsize
                     + b2_2d.size * b2_2d.dtype.itemsize)

    per_sample = C * HW * itemsize
    inv_hw = float(1.0 / HW)

    cost = pl.CostEstimate(
        flops=2 * N * C * HW + 4 * N * C * Cr,
        transcendentals=N * C,
        bytes_accessed=2 * N * C * HW * itemsize,
    )

    # ---------------- fused single-kernel path (fits VMEM) ------------------
    fused_need_min = 4 * per_sample + 2 * weights_bytes + (2 << 20)
    if fused_need_min <= vmem_cap:
        nb = _pick_nb(N, per_sample, block_target, num_tc)
        grid = (pl.cdiv(N, nb),)
        vmem_need = 4 * nb * per_sample + 2 * weights_bytes
        vmem_limit = int(min(max(vmem_need + (2 << 20), 16 << 20), vmem_cap))

        kernel = functools.partial(_se_fused_kernel, inv_hw=inv_hw)
        out_flat = pl.pallas_call(
            kernel,
            out_shape=jax.ShapeDtypeStruct((N, C, HW), x_nchw.dtype),
            grid_spec=pltpu.PrefetchScalarGridSpec(
                num_scalar_prefetch=0,
                grid=grid,
                in_specs=[
                    pl.BlockSpec((nb, C, HW), lambda i: (i, 0, 0)),
                    pl.BlockSpec((C, Cr), lambda i: (0, 0)),
                    pl.BlockSpec((1, Cr), lambda i: (0, 0)),
                    pl.BlockSpec((Cr, C), lambda i: (0, 0)),
                    pl.BlockSpec((1, C), lambda i: (0, 0)),
                ],
                out_specs=pl.BlockSpec((nb, C, HW), lambda i: (i, 0, 0)),
            ),
            compiler_params=pltpu.CompilerParams(
                dimension_semantics=("parallel",),
                vmem_limit_bytes=vmem_limit),
            cost_estimate=cost,
        )(x_flat, w1t, b1_2d, w2t, b2_2d)
        return out_flat.reshape(N, C, H, W)

    # ------------- split path: pool+MLP kernel, then streaming rescale ------
    # Triggered only when a single double-buffered (1, C, HW) in+out pair does
    # not fit the VMEM cap (very large per-sample C*H*W, esp. on v7x).
    nb2 = 1
    thw = max(128, (block_target // max(C * itemsize, 1)) // 128 * 128)
    if thw >= HW:
        thw = HW                            # single HW tile, block = full dim
    grid2 = (pl.cdiv(N, nb2), pl.cdiv(HW, thw))
    vmem_limit2 = int(min(max(4 * nb2 * C * thw * itemsize + 2 * weights_bytes
                              + (4 << 20), 16 << 20), vmem_cap))

    pool_kernel = functools.partial(_se_pool_mlp_kernel,
                                    inv_hw=inv_hw, hw=HW, thw=thw)
    s = pl.pallas_call(
        pool_kernel,
        out_shape=jax.ShapeDtypeStruct((N, 1, C), jnp.float32),
        grid_spec=pltpu.PrefetchScalarGridSpec(
            num_scalar_prefetch=0,
            grid=grid2,
            in_specs=[
                pl.BlockSpec((nb2, C, thw), lambda i, k: (i, 0, k)),
                pl.BlockSpec((C, Cr), lambda i, k: (0, 0)),
                pl.BlockSpec((1, Cr), lambda i, k: (0, 0)),
                pl.BlockSpec((Cr, C), lambda i, k: (0, 0)),
                pl.BlockSpec((1, C), lambda i, k: (0, 0)),
            ],
            out_specs=pl.BlockSpec((nb2, 1, C), lambda i, k: (i, 0, 0)),
            scratch_shapes=[pltpu.VMEM((nb2, C), jnp.float32)],
        ),
        compiler_params=pltpu.CompilerParams(
            dimension_semantics=("parallel", "arbitrary"),
            vmem_limit_bytes=vmem_limit2),
    )(x_flat, w1t, b1_2d, w2t, b2_2d)

    out_flat = pl.pallas_call(
        _se_rescale_kernel,
        out_shape=jax.ShapeDtypeStruct((N, C, HW), x_nchw.dtype),
        grid_spec=pltpu.PrefetchScalarGridSpec(
            num_scalar_prefetch=0,
            grid=grid2,
            in_specs=[
                pl.BlockSpec((nb2, C, thw), lambda i, k: (i, 0, k)),
                pl.BlockSpec((nb2, 1, C), lambda i, k: (i, 0, 0)),
            ],
            out_specs=pl.BlockSpec((nb2, C, thw), lambda i, k: (i, 0, k)),
        ),
        compiler_params=pltpu.CompilerParams(
            dimension_semantics=("parallel", "parallel"),
            vmem_limit_bytes=vmem_limit2),
        cost_estimate=cost,
    )(x_flat, s)
    return out_flat.reshape(N, C, H, W)


def se_module_reference(x_nchw, w1, b1, w2, b2):
    """Pure-JAX reference matching the PyTorch forward exactly."""
    pooled = jnp.mean(x_nchw, axis=(2, 3))                      # (N, C)
    h = jnp.maximum(pooled @ w1.T + b1, 0.0)                    # (N, C//r)
    s = jax.nn.sigmoid(h @ w2.T + b2)                           # (N, C)
    return x_nchw * s[:, :, None, None]


if __name__ == "__main__":
    # Small shapes consistent with the module: N=2, C=16, H=W=16, reduction=4.
    N, C, H, W = 2, 16, 16, 16
    reduction = 4
    Cr = C // reduction

    key = jax.random.PRNGKey(0)
    kx, k1, k2, k3, k4 = jax.random.split(key, 5)

    x = jax.random.normal(kx, (N, C, H, W), dtype=jnp.float32)
    # Deterministic synthetic parameters (nn.Linear shapes).
    w1 = jax.random.normal(k1, (Cr, C), dtype=jnp.float32) * 0.2
    b1 = jax.random.normal(k2, (Cr,), dtype=jnp.float32) * 0.1
    w2 = jax.random.normal(k3, (C, Cr), dtype=jnp.float32) * 0.2
    b2 = jax.random.normal(k4, (C,), dtype=jnp.float32) * 0.1

    out = se_module_forward(x, w1, b1, w2, b2)
    out = jax.block_until_ready(out)

    ref = se_module_reference(x, w1, b1, w2, b2)
    tol = 1e-5 if x.dtype == jnp.float32 else 2e-2   # dtype-aware tolerance
    assert out.shape == (N, C, H, W)
    assert jnp.allclose(out, ref, atol=tol, rtol=tol), "mismatch vs reference"

    print("KERNEL_OK")
</pallas_src>

<mosaic_0001>
module attributes {stable_mosaic.version = 11 : i64} {
  func.func @_se_fused_kernel(%arg0: i32, %arg1: memref<2x16x256xf32, #tpu.memory_space<vmem>>, %arg2: memref<16x4xf32, #tpu.memory_space<vmem>>, %arg3: memref<1x4xf32, #tpu.memory_space<vmem>>, %arg4: memref<4x16xf32, #tpu.memory_space<vmem>>, %arg5: memref<1x16xf32, #tpu.memory_space<vmem>>, %arg6: memref<2x16x256xf32, #tpu.memory_space<vmem>>) attributes {dimension_semantics = [#tpu.dimension_semantics<parallel>], iteration_bounds = array<i64: 1>, scalar_prefetch = 0 : i64, scratch_operands = 0 : i64, tpu.core_type = #tpu.core_type<tc>, window_params = [{transform_indices = @transform_0, window_bounds = array<i64: 2, 16, 256>}, {pipeline_mode = #tpu.pipeline_mode<synchronous>, transform_indices = @transform_1, window_bounds = array<i64: 16, 4>}, {pipeline_mode = #tpu.pipeline_mode<synchronous>, transform_indices = @transform_2, window_bounds = array<i64: 1, 4>}, {pipeline_mode = #tpu.pipeline_mode<synchronous>, transform_indices = @transform_3, window_bounds = array<i64: 4, 16>}, {pipeline_mode = #tpu.pipeline_mode<synchronous>, transform_indices = @transform_4, window_bounds = array<i64: 1, 16>}, {transform_indices = @transform_5, window_bounds = array<i64: 2, 16, 256>}]} {
    %c0 = arith.constant 0 : index
    %c0_0 = arith.constant 0 : index
    %c0_1 = arith.constant 0 : index
    %0 = vector.load %arg1[%c0, %c0_0, %c0_1] : memref<2x16x256xf32, #tpu.memory_space<vmem>>, vector<2x16x256xf32>
    %cst = arith.constant dense<0.000000e+00> : vector<2x16xf32>
    %1 = vector.multi_reduction <add>, %0, %cst [2] : vector<2x16x256xf32> to vector<2x16xf32>
    %cst_2 = arith.constant 3.906250e-03 : f32
    %2 = vector.broadcast %cst_2 : f32 to vector<2x16xf32>
    %3 = arith.mulf %1, %2 : vector<2x16xf32>
    %c0_3 = arith.constant 0 : index
    %c0_4 = arith.constant 0 : index
    %4 = vector.load %arg2[%c0_3, %c0_4] : memref<16x4xf32, #tpu.memory_space<vmem>>, vector<16x4xf32>
    %cst_5 = arith.constant dense<0.000000e+00> : vector<2x4xf32>
    %5 = tpu.matmul %3, %4, %cst_5 {dimension_numbers = #tpu.dot_dimension_numbers<[1], [0], [0], [1], [0, 0, 1, 1], [], []>} : vector<2x16xf32>, vector<16x4xf32>, vector<2x4xf32> -> vector<2x4xf32>
    %c0_6 = arith.constant 0 : index
    %c0_7 = arith.constant 0 : index
    %6 = vector.load %arg3[%c0_6, %c0_7] : memref<1x4xf32, #tpu.memory_space<vmem>>, vector<1x4xf32>
    %7 = vector.broadcast %6 : vector<1x4xf32> to vector<2x4xf32>
    %8 = arith.addf %5, %7 : vector<2x4xf32>
    %cst_8 = arith.constant 0.000000e+00 : f32
    %9 = vector.broadcast %cst_8 : f32 to vector<2x4xf32>
    %10 = arith.maximumf %8, %9 : vector<2x4xf32>
    %c0_9 = arith.constant 0 : index
    %c0_10 = arith.constant 0 : index
    %11 = vector.load %arg4[%c0_9, %c0_10] : memref<4x16xf32, #tpu.memory_space<vmem>>, vector<4x16xf32>
    %cst_11 = arith.constant dense<0.000000e+00> : vector<2x16xf32>
    %12 = tpu.matmul %10, %11, %cst_11 {dimension_numbers = #tpu.dot_dimension_numbers<[1], [0], [0], [1], [0, 0, 1, 1], [], []>} : vector<2x4xf32>, vector<4x16xf32>, vector<2x16xf32> -> vector<2x16xf32>
    %c0_12 = arith.constant 0 : index
    %c0_13 = arith.constant 0 : index
    %13 = vector.load %arg5[%c0_12, %c0_13] : memref<1x16xf32, #tpu.memory_space<vmem>>, vector<1x16xf32>
    %14 = vector.broadcast %13 : vector<1x16xf32> to vector<2x16xf32>
    %15 = arith.addf %12, %14 : vector<2x16xf32>
    %16 = arith.negf %15 : vector<2x16xf32>
    %17 = math.exp %16 : vector<2x16xf32>
    %cst_14 = arith.constant 1.000000e+00 : f32
    %18 = vector.broadcast %cst_14 : f32 to vector<2x16xf32>
    %19 = arith.addf %18, %17 : vector<2x16xf32>
    %20 = arith.divf %18, %19 : vector<2x16xf32>
    %21 = vector.shape_cast %20 : vector<2x16xf32> to vector<2x16x1xf32>
    %22 = vector.broadcast %21 : vector<2x16x1xf32> to vector<2x16x256xf32>
    %23 = arith.mulf %0, %22 : vector<2x16x256xf32>
    %c0_15 = arith.constant 0 : index
    %c0_16 = arith.constant 0 : index
    %c0_17 = arith.constant 0 : index
    %24 = vector.load %arg6[%c0_15, %c0_16, %c0_17] : memref<2x16x256xf32, #tpu.memory_space<vmem>>, vector<2x16x256xf32>
    tpu.vector_store %arg6[%c0_15, %c0_16, %c0_17], %23 {strides = array<i32>} : memref<2x16x256xf32, #tpu.memory_space<vmem>>, vector<2x16x256xf32>,
    return
  }
  func.func @transform_0(%arg0: i32) -> (i32, i32, i32) {
    %c0_i32 = arith.constant 0 : i32
    %c0_i32_0 = arith.constant 0 : i32
    %c0_i32_1 = arith.constant 0 : i32
    return %arg0, %c0_i32, %c0_i32_0 : i32, i32, i32
  }
  func.func @transform_1(%arg0: i32) -> (i32, i32) {
    %c0_i32 = arith.constant 0 : i32
    %c0_i32_0 = arith.constant 0 : i32
    %c0_i32_1 = arith.constant 0 : i32
    return %c0_i32, %c0_i32_0 : i32, i32
  }
  func.func @transform_2(%arg0: i32) -> (i32, i32) {
    %c0_i32 = arith.constant 0 : i32
    %c0_i32_0 = arith.constant 0 : i32
    %c0_i32_1 = arith.constant 0 : i32
    return %c0_i32, %c0_i32_0 : i32, i32
  }
  func.func @transform_3(%arg0: i32) -> (i32, i32) {
    %c0_i32 = arith.constant 0 : i32
    %c0_i32_0 = arith.constant 0 : i32
    %c0_i32_1 = arith.constant 0 : i32
    return %c0_i32, %c0_i32_0 : i32, i32
  }
  func.func @transform_4(%arg0: i32) -> (i32, i32) {
    %c0_i32 = arith.constant 0 : i32
    %c0_i32_0 = arith.constant 0 : i32
    %c0_i32_1 = arith.constant 0 : i32
    return %c0_i32, %c0_i32_0 : i32, i32
  }
  func.func @transform_5(%arg0: i32) -> (i32, i32, i32) {
    %c0_i32 = arith.constant 0 : i32
    %c0_i32_0 = arith.constant 0 : i32
    %c0_i32_1 = arith.constant 0 : i32
    return %arg0, %c0_i32, %c0_i32_0 : i32, i32, i32
  }
}

</mosaic_0001>

<llo_original>
// kernel: tpu_custom_call.1
$region0: #{tpu_custom_call.1}
  #allocation0 [shape = 'u32[]', space=smem, size = 0x4, offset = 0x4, fixed_abs, tag = 'smem constant byte address 0x4 - core index']
  #allocation1 [shape = 'u32[144,128]{1,0:T(1,128)}', space=vmem, size = 0x12000, scoped, tag = 'internal scratch']
  %s0 = inlined_call_operand.hbm [shape: f32[2,16,256], index: 0, kind: input, shape index: {}]
  %s1 = inlined_call_operand.vmem [shape: f32[16,4], index: 1, kind: input, shape index: {}]
  %s2 = inlined_call_operand.vmem [shape: f32[1,4], index: 2, kind: input, shape index: {}]
  %s3 = inlined_call_operand.vmem [shape: f32[4,16], index: 3, kind: input, shape index: {}]
  %s4 = inlined_call_operand.vmem [shape: f32[1,16], index: 4, kind: input, shape index: {}]
  %s5 = inlined_call_operand.hbm [shape: f32[2,16,256], index: 5, kind: output, shape index: {}]
  %s6 = sld [smem:[#allocation0]]
  $region34: #{tpu_custom_call.1} parent=0
    _
  %s8 = ssub.s32 1, %s6
  %s9 = scalar_select 0, %s8, %s6
  $region1: #{tpu_custom_call.1} parent=0
    #allocation2 [shape = 'u8[32768]{0}', space=vmem, size = 0x8000, scoped, tag = 'input window, operand 0, single buffered']
    #allocation3 [shape = 's32[1]{0}', space=sflag, size = 0x4, scoped, tag = 'scoped memory for tpu_custom_call.1']
    #allocation4 [shape = 's32[1]{0}', space=sflag, size = 0x4, scoped, tag = 'scoped memory for tpu_custom_call.1']
    #allocation5 [shape = 'u8[32768]{0}', space=vmem, size = 0x8000, scoped, tag = 'output window, operand 0, single buffered']
    %10 = vsyncpa [#allocation3], 0
    %11 = vsyncpa [#allocation4], 0
    // Predicated region
    $region2: #{tpu_custom_call.1} parent=1 // pred_check
      _
    $region3: #{tpu_custom_call.1} parent=1 // pred_check_branch
      %13 = sbr.rel (0) target = $region5
    $region4: #{tpu_custom_call.1} parent=1 // pred_region
      %s15 = ssub.s32 1024, 1024
      %16 = vsyncadd [#allocation3], %s15
      %s17 = sshll.u32 [#allocation2], 4
      %s18 = int_to_ptr.vmem [resolvable:$true] %s17
      %23 = dma.hbm_to_vmem [thread:$0]  %s0, 1024, %s18, [#allocation3], 256, 256, 16
    $region5: #{tpu_custom_call.1} parent=1 // pred_fallthru
      _
    // Predicated region
    $region6: #{tpu_custom_call.1} parent=1 // pred_check
      _
    $region7: #{tpu_custom_call.1} parent=1 // pred_check_branch
      %25 = sbr.rel (0) target = $region9
    $region8: #{tpu_custom_call.1} parent=1 // pred_region
      _
    $region9: #{tpu_custom_call.1} parent=1 // pred_fallthru
      _
    // Predicated region
    $region10: #{tpu_custom_call.1} parent=1 // pred_check
      _
    $region11: #{tpu_custom_call.1} parent=1 // pred_check_branch
      %27 = sbr.rel (0) target = $region13
    $region12: #{tpu_custom_call.1} parent=1 // pred_region
      _
    $region13: #{tpu_custom_call.1} parent=1 // pred_fallthru
      _
    // Predicated region
    $region14: #{tpu_custom_call.1} parent=1 // pred_check
      _
    $region15: #{tpu_custom_call.1} parent=1 // pred_check_branch
      %29 = sbr.rel (0) target = $region17
    $region16: #{tpu_custom_call.1} parent=1 // pred_region
      _
    $region17: #{tpu_custom_call.1} parent=1 // pred_fallthru
      _
    // Predicated region
    $region18: #{tpu_custom_call.1} parent=1 // pred_check
      _
    $region19: #{tpu_custom_call.1} parent=1 // pred_check_branch
      %31 = sbr.rel (0) target = $region21
    $region20: #{tpu_custom_call.1} parent=1 // pred_region
      _
    $region21: #{tpu_custom_call.1} parent=1 // pred_fallthru
      _
    // Predicated region
    $region22: #{tpu_custom_call.1} parent=1 // pred_check
      _
    $region23: #{tpu_custom_call.1} parent=1 // pred_check_branch
      %33 = sbr.rel (0) target = $region25
    $region24: #{tpu_custom_call.1} parent=1 // pred_region
      %34 = dma.done [#allocation3], 1024
    $region25: #{tpu_custom_call.1} parent=1 // pred_fallthru
      _
    %v35 = vld [vmem:[#allocation2] sm:$0xff]
    %v36 = vld [vmem:[#allocation2 + $0x8] sm:$0xff]
    %v37 = vld [vmem:[#allocation2 + $0x10] sm:$0xff]
    %v38 = vld [vmem:[#allocation2 + $0x18] sm:$0xff]
    %v39 = vld [vmem:[#allocation2 + $0x20] sm:$0xff]
    %v40 = vld [vmem:[#allocation2 + $0x28] sm:$0xff]
    %v41 = vld [vmem:[#allocation2 + $0x30] sm:$0xff]
    %v42 = vld [vmem:[#allocation2 + $0x38] sm:$0xff]
    %v43 = vadd.f32 %v35, %v36
    %44 = vadd.xlane.f32.xlu0 %v43
    %v45 = vpop.xlane.xlu0 %44
    %v46 = vadd.f32 %v37, %v38
    %47 = vadd.xlane.f32.xlu0 %v46
    %v48 = vpop.xlane.xlu0 %47
    %v49 = vadd.f32 %v39, %v40
    %50 = vadd.xlane.f32.xlu0 %v49
    %v51 = vpop.xlane.xlu0 %50
    %v52 = vadd.f32 %v41, %v42
    %53 = vadd.xlane.f32.xlu0 %v52
    %v54 = vpop.xlane.xlu0 %53
    %v55 = vmul.f32 %v45, 0.00390625
    %v56 = vmul.f32 %v48, 0.00390625
    %v57 = vmul.f32 %v51, 0.00390625
    %v58 = vmul.f32 %v54, 0.00390625
    %v59 = vld [vmem:[%s1] sm:$0xff]
    %v60 = vld [vmem:[%s1 + $0x8] sm:$0xff]
    %v61 = vld [vmem:[%s2] sm:$0x1]
    %v63 = vlaneseq
    %v64 = vshrl.u32 %v63, 7
    %v65 = vsub.s32 0, %v64
    %v66 = vrot.slane %v61, %v65
    %v72 = vlaneseq
    %v73 = vand.u32 %v72, 127
    %v74 = vlaneseq
    %v75 = vshrl.u32 %v74, 7
    %v76 = vsub.s32 %v73, %v75
    %v77 = vrot.slane %v55, %v76
    %v78 = vadd.s32 %v73, 4294967288
    %v79 = vlaneseq
    %v80 = vshrl.u32 %v79, 7
    %v81 = vsub.s32 %v78, %v80
    %v82 = vrot.slane %v56, %v81
    %vm83 = vcmask 130112
    %v84 = vsel %vm83, %v82, %v77
    %v85 = vlaneseq
    %v86 = vshrl.u32 %v85, 7
    %v87 = vsub.s32 %v73, %v86
    %v88 = vrot.slane %v57, %v87
    %v89 = vlaneseq
    %v90 = vshrl.u32 %v89, 7
    %v91 = vsub.s32 %v78, %v90
    %v92 = vrot.slane %v58, %v91
    %v93 = vsel %vm83, %v92, %v88
    %vm94 = vcmask 1041409
    %v95 = vsel %vm94, %v93, %v84
    %vm96 = vcmask 130048
    %v97 = vsel %vm96, %v95, 0
    %99 = vmatprep.subr.mxu0 0.0
    %100 = vmatpush1.msra.mxu0 %v59
    %101 = vmatprep.subr.mxu0 0.0
    %102 = vmatpush1.msra.mxu0 %v60
    %103 = vmatprep.subr.mxu0 0.0
    %104 = vmatpush1.msra.mxu0 0.0
    %105 = vmatprep.subr.mxu0 0.0
    %106 = vmatpush1.msra.mxu0 0.0
    %107 = vmatprep.subr.mxu0 0.0
    %108 = vmatpush1.msra.mxu0 0.0
    %109 = vmatprep.subr.mxu0 0.0
    %110 = vmatpush1.msra.mxu0 0.0
    %111 = vmatprep.subr.mxu0 0.0
    %112 = vmatpush1.msra.mxu0 0.0
    %113 = vmatprep.subr.mxu0 0.0
    %114 = vmatpush1.msra.mxu0 0.0
    %115 = vmatprep.subr.mxu0 0.0
    %116 = vmatpush1.msra.mxu0 0.0
    %117 = vmatprep.subr.mxu0 0.0
    %118 = vmatpush1.msra.mxu0 0.0
    %119 = vmatprep.subr.mxu0 0.0
    %120 = vmatpush1.msra.mxu0 0.0
    %121 = vmatprep.subr.mxu0 0.0
    %122 = vmatpush1.msra.mxu0 0.0
    %123 = vmatprep.subr.mxu0 0.0
    %124 = vmatpush1.msra.mxu0 0.0
    %125 = vmatprep.subr.mxu0 0.0
    %126 = vmatpush1.msra.mxu0 0.0
    %127 = vmatprep.subr.mxu0 0.0
    %128 = vmatpush1.msra.mxu0 0.0
    %129 = vmatprep.subr.mxu0 0.0
    %130 = vmatpush1.msra.mxu0 0.0
    %131 = vmatprep.subr.mxu0 0.0
    %132 = vmatpush1.msra.mxu0 0.0
    %133 = vmatprep.subr.mxu0 0.0
    %134 = vmatpush1.msra.mxu0 0.0
    %135 = vmatprep.subr.mxu0 0.0
    %136 = vmatpush1.msra.mxu0 0.0
    %137 = vmatprep.subr.mxu0 0.0
    %138 = vmatpush1.msra.mxu0 0.0
    %139 = vmatprep.subr.mxu0 0.0
    %140 = vmatpush1.msra.mxu0 0.0
    %141 = vmatprep.subr.mxu0 0.0
    %142 = vmatpush1.msra.mxu0 0.0
    %143 = vmatprep.subr.mxu0 0.0
    %144 = vmatpush1.msra.mxu0 0.0
    %145 = vmatprep.subr.mxu0 0.0
    %146 = vmatpush1.msra.mxu0 0.0
    %147 = vmatprep.subr.mxu0 0.0
    %148 = vmatpush1.msra.mxu0 0.0
    %149 = vmatprep.subr.mxu0 0.0
    %150 = vmatpush1.msra.mxu0 0.0
    %151 = vmatprep.subr.mxu0 0.0
    %152 = vmatpush1.msra.mxu0 0.0
    %153 = vmatprep.subr.mxu0 0.0
    %154 = vmatpush1.msra.mxu0 0.0
    %155 = vmatprep.subr.mxu0 0.0
    %156 = vmatpush1.msra.mxu0 0.0
    %157 = vmatprep.subr.mxu0 0.0
    %158 = vmatpush1.msra.mxu0 0.0
    %159 = vmatprep.subr.mxu0 0.0
    %160 = vmatpush1.msra.mxu0 0.0
    %161 = vmatprep.subr.mxu0 0.0
    %162 = vmatpush1.msra.mxu0 0.0
    %163 = vmatprep.mubr.f32.mxu0 0.0
    %164 = vmatmul.mubr.f32.gmra.mrb[0].mxu0 %v97
    %v165 = vpop.f32.mrb[0].mxu0
    %v166 = vadd.f32 %v66, %v165
    %v167 = vpop.f32.mrb[0].mxu0
    %168 = vdwg.mxu0
    %v169 = vmax.f32 %v166, 0.0
    %v170 = vld [vmem:[%s3] sm:$0xf]
    %v171 = vld [vmem:[%s4] sm:$0x1]
    %v173 = vlaneseq
    %v174 = vshrl.u32 %v173, 7
    %v175 = vsub.s32 0, %v174
    %v176 = vrot.slane %v171, %v175
    %vm178 = vcmask 31744
    %v180 = vsel %vm178, %v169, 0
    %vm182 = vcmask 1043456
    %v184 = vsel %vm182, %v170, 0
    %186 = vmatprep.subr.mxu0 0.0
    %187 = vmatpush1.msra.mxu0 %v184
    %188 = vmatprep.subr.mxu0 0.0
    %189 = vmatpush1.msra.mxu0 0.0
    %190 = vmatprep.subr.mxu0 0.0
    %191 = vmatpush1.msra.mxu0 0.0
    %192 = vmatprep.subr.mxu0 0.0
    %193 = vmatpush1.msra.mxu0 0.0
    %194 = vmatprep.subr.mxu0 0.0
    %195 = vmatpush1.msra.mxu0 0.0
    %196 = vmatprep.subr.mxu0 0.0
    %197 = vmatpush1.msra.mxu0 0.0
    %198 = vmatprep.subr.mxu0 0.0
    %199 = vmatpush1.msra.mxu0 0.0
    %200 = vmatprep.subr.mxu0 0.0
    %201 = vmatpush1.msra.mxu0 0.0
    %202 = vmatprep.subr.mxu0 0.0
    %203 = vmatpush1.msra.mxu0 0.0
    %204 = vmatprep.subr.mxu0 0.0
    %205 = vmatpush1.msra.mxu0 0.0
    %206 = vmatprep.subr.mxu0 0.0
    %207 = vmatpush1.msra.mxu0 0.0
    %208 = vmatprep.subr.mxu0 0.0
    %209 = vmatpush1.msra.mxu0 0.0
    %210 = vmatprep.subr.mxu0 0.0
    %211 = vmatpush1.msra.mxu0 0.0
    %212 = vmatprep.subr.mxu0 0.0
    %213 = vmatpush1.msra.mxu0 0.0
    %214 = vmatprep.subr.mxu0 0.0
    %215 = vmatpush1.msra.mxu0 0.0
    %216 = vmatprep.subr.mxu0 0.0
    %217 = vmatpush1.msra.mxu0 0.0
    %218 = vmatprep.subr.mxu0 0.0
    %219 = vmatpush1.msra.mxu0 0.0
    %220 = vmatprep.subr.mxu0 0.0
    %221 = vmatpush1.msra.mxu0 0.0
    %222 = vmatprep.subr.mxu0 0.0
    %223 = vmatpush1.msra.mxu0 0.0
    %224 = vmatprep.subr.mxu0 0.0
    %225 = vmatpush1.msra.mxu0 0.0
    %226 = vmatprep.subr.mxu0 0.0
    %227 = vmatpush1.msra.mxu0 0.0
    %228 = vmatprep.subr.mxu0 0.0
    %229 = vmatpush1.msra.mxu0 0.0
    %230 = vmatprep.subr.mxu0 0.0
    %231 = vmatpush1.msra.mxu0 0.0
    %232 = vmatprep.subr.mxu0 0.0
    %233 = vmatpush1.msra.mxu0 0.0
    %234 = vmatprep.subr.mxu0 0.0
    %235 = vmatpush1.msra.mxu0 0.0
    %236 = vmatprep.subr.mxu0 0.0
    %237 = vmatpush1.msra.mxu0 0.0
    %238 = vmatprep.subr.mxu0 0.0
    %239 = vmatpush1.msra.mxu0 0.0
    %240 = vmatprep.subr.mxu0 0.0
    %241 = vmatpush1.msra.mxu0 0.0
    %242 = vmatprep.subr.mxu0 0.0
    %243 = vmatpush1.msra.mxu0 0.0
    %244 = vmatprep.subr.mxu0 0.0
    %245 = vmatpush1.msra.mxu0 0.0
    %246 = vmatprep.subr.mxu0 0.0
    %247 = vmatpush1.msra.mxu0 0.0
    %248 = vmatprep.subr.mxu0 0.0
    %249 = vmatpush1.msra.mxu0 0.0
    %250 = vmatprep.mubr.f32.mxu0 0.0
    %251 = vmatmul.mubr.f32.gmra.mrb[0].mxu0 %v180
    %v252 = vpop.f32.mrb[0].mxu0
    %v253 = vadd.f32 %v176, %v252
    %v254 = vpop.f32.mrb[0].mxu0
    %255 = vdwg.mxu0
    %v256 = vxor.u32 %v253, 2147483648
    %v257 = vmul.f32 %v256, 1.442695
    %v258 = vpow.pop %v257
    %v259 = vadd.f32 %v258, 1.0
    %v260 = vrcp.pop %v259
    %v261 = vmul.f32 1.0, %v260
    %v262 = vlaneseq
    %v263 = vshrl.u32 %v262, 7
    %v264 = vsub.s32 0, %v263
    %v265 = vrot.slane %v261, %v264
    %267 = vbcast.lane.b32.xlu0 %v265, 256
    %v268 = vpop.permute.xlu0 %267
    %s270 = sor.u32 256, 8
    %271 = vbcast.lane.b32.xlu0 %v265, %s270
    %v272 = vpop.permute.xlu0 %271
    %v273 = vlaneseq
    %v274 = vshrl.u32 %v273, 7
    %v275 = vsub.s32 1, %v274
    %v276 = vrot.slane %v261, %v275
    %278 = vbcast.lane.b32.xlu0 %v276, 256
    %v279 = vpop.permute.xlu0 %278
    %s281 = sor.u32 256, 8
    %282 = vbcast.lane.b32.xlu0 %v276, %s281
    %v283 = vpop.permute.xlu0 %282
    %v284 = vmul.f32 %v35, %v268
    %v285 = vmul.f32 %v36, %v268
    %v286 = vmul.f32 %v37, %v272
    %v287 = vmul.f32 %v38, %v272
    %v288 = vmul.f32 %v39, %v279
    %v289 = vmul.f32 %v40, %v279
    %v290 = vmul.f32 %v41, %v283
    %v291 = vmul.f32 %v42, %v283
    %292 = vst [vmem:[#allocation5] sm:$0xff] %v284
    %293 = vst [vmem:[#allocation5 + $0x8] sm:$0xff] %v285
    %294 = vst [vmem:[#allocation5 + $0x10] sm:$0xff] %v286
    %295 = vst [vmem:[#allocation5 + $0x18] sm:$0xff] %v287
    %296 = vst [vmem:[#allocation5 + $0x20] sm:$0xff] %v288
    %297 = vst [vmem:[#allocation5 + $0x28] sm:$0xff] %v289
    %298 = vst [vmem:[#allocation5 + $0x30] sm:$0xff] %v290
    %299 = vst [vmem:[#allocation5 + $0x38] sm:$0xff] %v291
    // Predicated region
    $region26: #{tpu_custom_call.1} parent=1 // pred_check
      _
    $region27: #{tpu_custom_call.1} parent=1 // pred_check_branch
      %301 = sbr.rel (0) target = $region29
    $region28: #{tpu_custom_call.1} parent=1 // pred_region
      %s303 = ssub.s32 1024, 1024
      %304 = vsyncadd [#allocation4], %s303
      %s305 = sshll.u32 [#allocation5], 4
      %s306 = int_to_ptr.vmem [resolvable:$true] %s305
      %311 = dma.vmem_to_hbm [thread:$0]  %s306, 1024, %s5, [#allocation4], 256, 256, 16
    $region29: #{tpu_custom_call.1} parent=1 // pred_fallthru
      _
    // Predicated region
    $region30: #{tpu_custom_call.1} parent=1 // pred_check
      _
    $region31: #{tpu_custom_call.1} parent=1 // pred_check_branch
      %313 = sbr.rel (0) target = $region33
    $region32: #{tpu_custom_call.1} parent=1 // pred_region
      %314 = dma.done [#allocation4], 1024
    $region33: #{tpu_custom_call.1} parent=1 // pred_fallthru
      _
    %315 = vsyncpa [#allocation3], 1
    %316 = vsyncpa [#allocation4], 1

</llo_original>
